<compile_context>
chip_gen: v7x
topology: tpu7x:2x2x1
jax: 0.10.0
libtpu: 0.0.40
codegen_flags: <defaults>
</compile_context>

<pallas_src>
import functools
import math

import jax
import jax.numpy as jnp
from jax import lax
from jax.experimental import pallas as pl
from jax.experimental.pallas import tpu as pltpu


# ----------------------------------------------------------------------------
# Model configuration (mirrors VectoralResidualModel.__init__ arguments)
# ----------------------------------------------------------------------------
STATE_SPACE_SIZE = 8
RECURRENCE_HIDDEN_LAYERS = [32, 32]
INPUT_SIZE = 8
TIME_EMBEDDING_SIZE = 16
NONLIN_FIRST = True

ALL_LAYER_SIZES = RECURRENCE_HIDDEN_LAYERS + [STATE_SPACE_SIZE]
D_CONCAT = STATE_SPACE_SIZE + TIME_EMBEDDING_SIZE + INPUT_SIZE
NUM_LINEAR = len(ALL_LAYER_SIZES)  # Softplus after every linear except the last

_NT = (((1,), (1,)), ((), ()))  # dot_general: contract the last axis of both operands


def _softplus(x):
    # Numerically stable softplus (matches torch.nn.Softplus / jax.nn.softplus).
    return jnp.maximum(x, 0.0) + jnp.log1p(jnp.exp(-jnp.abs(x)))


def _ceil_to(n, m):
    return ((n + m - 1) // m) * m


# ----------------------------------------------------------------------------
# Kernel.
#   x_ref:   [row_tile, S]   natural layout (streamed)
#   inp_ref: [row_tile, I]   natural layout (streamed)
#   temb_ref:[H0, row_tile]  resident, holds W0_e @ temb^T + b0 tiled over rows
#   weights/biases: resident
#   output:  [out_dim, row_tile]  feature-major (lane-dense store)
# ----------------------------------------------------------------------------
def _mlp_kernel(*refs, num_linear: int, nonlin_first: bool, state_size: int):
    x_ref, inp_ref, temb_ref, w0s_ref, w0i_ref = refs[:5]
    n_tail = num_linear - 1
    w_refs = refs[5:5 + n_tail]
    b_refs = refs[5 + n_tail:5 + 2 * n_tail]
    o_ref = refs[-1]

    x_nat = x_ref[...].astype(jnp.float32)      # [rows, S]
    inp_nat = inp_ref[...].astype(jnp.float32)  # [rows, I]

    if nonlin_first:
        # Relayout x to feature-major via a tiny identity NT-matmul so the
        # softplus runs on lane-dense [S, rows] vregs instead of 8/128-dense
        # [rows, S] vregs.  The MXU slot is essentially idle here.
        s = state_size
        eye_s = (lax.broadcasted_iota(jnp.int32, (s, s), 0)
                 == lax.broadcasted_iota(jnp.int32, (s, s), 1)).astype(jnp.float32)
        x_fm = lax.dot_general(eye_s, x_nat, _NT,
                               preferred_element_type=jnp.float32)      # [S, rows]
        x_contrib = jnp.dot(w0s_ref[...], _softplus(x_fm),
                            preferred_element_type=jnp.float32)         # [H0, rows]
    else:
        # No pre-nonlinearity: contract the feature axis of the natural block.
        x_contrib = lax.dot_general(w0s_ref[...], x_nat, _NT,
                                    preferred_element_type=jnp.float32)

    # Layer 0:  W0_s @ sp(x)^T + W0_i @ inp^T + (W0_e @ temb^T + b0)
    h = (x_contrib
         + lax.dot_general(w0i_ref[...], inp_nat, _NT,
                           preferred_element_type=jnp.float32)
         + temb_ref[...])

    if n_tail > 0:
        h = _softplus(h)
    for li in range(n_tail):
        h = jnp.dot(w_refs[li][...], h, preferred_element_type=jnp.float32)
        h = h + b_refs[li][...]              # [out, 1] broadcast along lanes
        if li != n_tail - 1:
            h = _softplus(h)

    o_ref[...] = h.astype(o_ref.dtype)


# ----------------------------------------------------------------------------
# Wrapper
# ----------------------------------------------------------------------------
def vectoral_residual_forward(x, t_embeddings_schedule, input_vector, params,
                              *, nonlin_first=NONLIN_FIRST, row_tile_target=8192):
    """
    x:                      [..., T, state_space_size]
    t_embeddings_schedule:  [T, time_embedding_size]
    input_vector:           [..., T, input_size]
    params: dict with 'weights' (list of [out, in] -- PyTorch layout)
            and 'biases' (list of [out, 1])
    returns:                [..., T, state_space_size]
    """
    weights = [w.astype(jnp.float32) for w in params["weights"]]
    biases = [b.astype(jnp.float32) for b in params["biases"]]
    num_linear = len(weights)

    batch_dims = x.shape[:-2]
    T = x.shape[-2]
    S = x.shape[-1]
    E = t_embeddings_schedule.shape[-1]
    I = input_vector.shape[-1]
    H0 = weights[0].shape[0]
    out_dim = weights[-1].shape[0]

    n_rows = T
    for d in batch_dims:
        n_rows *= d

    # row_tile: multiple of T (so every grid block starts at time-phase 0 and
    # the resident temb block pattern is identical for all blocks) and of 128
    # (lane-dense feature-major output / temb blocks).  Target ~8192 rows to
    # amortize the ~0.35us per-grid-step overhead.
    # NOTE: for pathological T with lcm(T,128) >> 16K a streamed per-row temb
    # contribution (or a per-block phase roll) would be needed instead.
    quantum = math.lcm(T, 128)
    row_tile = quantum * max(1, row_tile_target // quantum)
    row_tile = min(row_tile, _ceil_to(n_rows, quantum))

    # Flatten (..., T, feat) -> [rows, feat]: layout-preserving, no HBM pass.
    x2 = x.reshape(n_rows, S)
    inp2 = input_vector.reshape(n_rows, I)

    if n_rows < row_tile:
        # Tiny input: pad once up to a single tile (negligible at this size).
        pad = row_tile - n_rows
        x2 = jnp.pad(x2, ((0, pad), (0, 0)))
        inp2 = jnp.pad(inp2, ((0, pad), (0, 0)))
        n_rows_eff = row_tile
    else:
        # Large input: no padding pass.  A ragged last block is handled by
        # Pallas OOB masking; garbage rows stay confined to dropped columns
        # because all contractions are over the feature axis only.
        n_rows_eff = n_rows
    grid = (pl.cdiv(n_rows_eff, row_tile),)

    # Split layer 0; fold  W0_e @ temb^T + b0  into a VMEM-resident block.
    W0, b0 = weights[0], biases[0]
    W0_s, W0_e, W0_i = W0[:, :S], W0[:, S:S + E], W0[:, S + E:]
    temb_contrib = W0_e @ t_embeddings_schedule.astype(jnp.float32).T + b0  # [H0, T]
    temb_block = jnp.tile(temb_contrib, (1, row_tile // T))                 # [H0, row_tile]

    w_rest = weights[1:]
    b_rest = biases[1:]

    kernel = functools.partial(_mlp_kernel, num_linear=num_linear,
                               nonlin_first=nonlin_first, state_size=S)

    resident = lambda shp: pl.BlockSpec(shp, lambda i: (0, 0))
    in_specs = [
        pl.BlockSpec((row_tile, S), lambda i: (i, 0)),   # x       (streamed, natural)
        pl.BlockSpec((row_tile, I), lambda i: (i, 0)),   # inp     (streamed, natural)
        resident((H0, row_tile)),                        # temb+b0 (resident)
        resident(W0_s.shape), resident(W0_i.shape),
    ]
    in_specs += [resident(w.shape) for w in w_rest]
    in_specs += [resident(b.shape) for b in b_rest]
    out_spec = pl.BlockSpec((out_dim, row_tile), lambda i: (0, i))

    # VMEM budget: double-buffered streams + resident blocks + a few fp32
    # intermediates.  Explicit limit so large tiles work on v5e (16 MiB scoped
    # default) while staying inside v7x's 64 MiB physical VMEM.
    h_max = max(w.shape[0] for w in weights)
    approx_vmem = 4 * (2 * row_tile * (S + I) + 2 * row_tile * out_dim
                       + row_tile * H0 + 4 * row_tile * h_max
                       + sum(w.size for w in weights) + sum(b.size for b in biases))
    vmem_limit = int(min(max(32 << 20, 2 * approx_vmem), 64 << 20))

    outT = pl.pallas_call(
        kernel,
        out_shape=jax.ShapeDtypeStruct((out_dim, n_rows_eff), x.dtype),
        grid_spec=pltpu.PrefetchScalarGridSpec(
            num_scalar_prefetch=0,
            grid=grid,
            in_specs=in_specs,
            out_specs=out_spec,
        ),
        compiler_params=pltpu.CompilerParams(
            # v7x note: swap to pltpu.CORE_PARALLEL if profiling shows the row
            # grid is not sharded across both TensorCores.
            dimension_semantics=("parallel",),
            vmem_limit_bytes=vmem_limit,
        ),
    )(x2, inp2, temb_block, W0_s, W0_i, *w_rest, *b_rest)

    # Consumer wants [..., T, out_dim]; keep the lane-dense [out_dim, rows]
    # kernel store and accept one fused slice+transpose here.
    out = outT[:, :n_rows].T
    return out.reshape(*batch_dims, T, out_dim)


# ----------------------------------------------------------------------------
# Deterministic parameter construction (PyTorch nn.Linear layout: W [out, in])
# ----------------------------------------------------------------------------
def init_params(key):
    layer_ins = [D_CONCAT] + ALL_LAYER_SIZES[:-1]
    layer_outs = ALL_LAYER_SIZES
    weights, biases = [], []
    for fan_in, fan_out in zip(layer_ins, layer_outs):
        key, kw, kb = jax.random.split(key, 3)
        bound = 1.0 / jnp.sqrt(fan_in)
        w = jax.random.uniform(kw, (fan_out, fan_in), jnp.float32, -bound, bound)
        b = jax.random.uniform(kb, (fan_out, 1), jnp.float32, -bound, bound)
        weights.append(w)
        biases.append(b)
    return {"weights": weights, "biases": biases}


def reference_forward(x, t_emb, inp, params, nonlin_first=NONLIN_FIRST):
    h = jax.nn.softplus(x) if nonlin_first else x
    t_b = jnp.broadcast_to(t_emb, x.shape[:-2] + t_emb.shape).astype(x.dtype)
    h = jnp.concatenate([h, t_b, inp], axis=-1)
    ws, bs = params["weights"], params["biases"]
    for li in range(len(ws)):
        h = h @ ws[li].T + bs[li][:, 0]
        if li != len(ws) - 1:
            h = jax.nn.softplus(h)
    return h


if __name__ == "__main__":
    key = jax.random.PRNGKey(0)
    k_p, k_x, k_t, k_i = jax.random.split(key, 4)

    params = init_params(k_p)

    batch = 2
    T = 8
    x = jax.random.normal(k_x, (batch, T, STATE_SPACE_SIZE), jnp.float32)
    t_emb = jax.random.normal(k_t, (T, TIME_EMBEDDING_SIZE), jnp.float32)
    inp = jax.random.normal(k_i, (batch, T, INPUT_SIZE), jnp.float32)

    out = vectoral_residual_forward(x, t_emb, inp, params)
    out = jax.block_until_ready(out)

    ref = reference_forward(x, t_emb, inp, params)
    assert out.shape == (batch, T, STATE_SPACE_SIZE)
    assert jnp.allclose(out, ref, atol=1e-4, rtol=1e-4), "mismatch vs reference"

    print("KERNEL_OK")
</pallas_src>

<mosaic_0001>
module attributes {stable_mosaic.version = 11 : i64} {
  func.func @_mlp_kernel(%arg0: i32, %arg1: memref<128x8xf32, #tpu.memory_space<vmem>>, %arg2: memref<128x8xf32, #tpu.memory_space<vmem>>, %arg3: memref<32x128xf32, #tpu.memory_space<vmem>>, %arg4: memref<32x8xf32, #tpu.memory_space<vmem>>, %arg5: memref<32x8xf32, #tpu.memory_space<vmem>>, %arg6: memref<32x32xf32, #tpu.memory_space<vmem>>, %arg7: memref<8x32xf32, #tpu.memory_space<vmem>>, %arg8: memref<32x1xf32, #tpu.memory_space<vmem>>, %arg9: memref<8x1xf32, #tpu.memory_space<vmem>>, %arg10: memref<8x128xf32, #tpu.memory_space<vmem>>) attributes {dimension_semantics = [#tpu.dimension_semantics<parallel>], iteration_bounds = array<i64: 1>, scalar_prefetch = 0 : i64, scratch_operands = 0 : i64, tpu.core_type = #tpu.core_type<tc>, window_params = [{transform_indices = @transform_0, window_bounds = array<i64: 128, 8>}, {transform_indices = @transform_1, window_bounds = array<i64: 128, 8>}, {pipeline_mode = #tpu.pipeline_mode<synchronous>, transform_indices = @transform_2, window_bounds = array<i64: 32, 128>}, {pipeline_mode = #tpu.pipeline_mode<synchronous>, transform_indices = @transform_3, window_bounds = array<i64: 32, 8>}, {pipeline_mode = #tpu.pipeline_mode<synchronous>, transform_indices = @transform_4, window_bounds = array<i64: 32, 8>}, {pipeline_mode = #tpu.pipeline_mode<synchronous>, transform_indices = @transform_5, window_bounds = array<i64: 32, 32>}, {pipeline_mode = #tpu.pipeline_mode<synchronous>, transform_indices = @transform_6, window_bounds = array<i64: 8, 32>}, {pipeline_mode = #tpu.pipeline_mode<synchronous>, transform_indices = @transform_7, window_bounds = array<i64: 32, 1>}, {pipeline_mode = #tpu.pipeline_mode<synchronous>, transform_indices = @transform_8, window_bounds = array<i64: 8, 1>}, {transform_indices = @transform_9, window_bounds = array<i64: 8, 128>}]} {
    %c0 = arith.constant 0 : index
    %c0_0 = arith.constant 0 : index
    %0 = vector.load %arg1[%c0, %c0_0] : memref<128x8xf32, #tpu.memory_space<vmem>>, vector<128x8xf32>
    %c0_1 = arith.constant 0 : index
    %c0_2 = arith.constant 0 : index
    %1 = vector.load %arg2[%c0_1, %c0_2] : memref<128x8xf32, #tpu.memory_space<vmem>>, vector<128x8xf32>
    %2 = tpu.iota {dimensions = array<i32: 0>} : vector<8x8xi32>
    %3 = tpu.iota {dimensions = array<i32: 1>} : vector<8x8xi32>
    %4 = arith.cmpi eq, %2, %3 : vector<8x8xi32>
    %5 = arith.extui %4 : vector<8x8xi1> to vector<8x8xi32>
    %6 = arith.sitofp %5 : vector<8x8xi32> to vector<8x8xf32>
    %cst = arith.constant dense<0.000000e+00> : vector<8x128xf32>
    %7 = tpu.matmul %6, %0, %cst {dimension_numbers = #tpu.dot_dimension_numbers<[1], [1], [0], [0], [0, 0, 1, 0], [], []>} : vector<8x8xf32>, vector<128x8xf32>, vector<8x128xf32> -> vector<8x128xf32>
    %c0_3 = arith.constant 0 : index
    %c0_4 = arith.constant 0 : index
    %8 = vector.load %arg4[%c0_3, %c0_4] : memref<32x8xf32, #tpu.memory_space<vmem>>, vector<32x8xf32>
    %cst_5 = arith.constant 0.000000e+00 : f32
    %9 = vector.broadcast %cst_5 : f32 to vector<8x128xf32>
    %10 = arith.maximumf %7, %9 : vector<8x128xf32>
    %11 = math.absf %7 : vector<8x128xf32>
    %cst_6 = arith.constant 0.000000e+00 : f32
    %12 = vector.broadcast %cst_6 : f32 to vector<8x128xf32>
    %13 = arith.subf %12, %11 : vector<8x128xf32>
    %14 = math.exp %13 : vector<8x128xf32>
    %15 = math.log1p %14 : vector<8x128xf32>
    %16 = arith.addf %10, %15 : vector<8x128xf32>
    %cst_7 = arith.constant dense<0.000000e+00> : vector<32x128xf32>
    %17 = tpu.matmul %8, %16, %cst_7 {dimension_numbers = #tpu.dot_dimension_numbers<[1], [0], [0], [1], [0, 0, 1, 1], [], []>} : vector<32x8xf32>, vector<8x128xf32>, vector<32x128xf32> -> vector<32x128xf32>
    %c0_8 = arith.constant 0 : index
    %c0_9 = arith.constant 0 : index
    %18 = vector.load %arg5[%c0_8, %c0_9] : memref<32x8xf32, #tpu.memory_space<vmem>>, vector<32x8xf32>
    %cst_10 = arith.constant dense<0.000000e+00> : vector<32x128xf32>
    %19 = tpu.matmul %18, %1, %cst_10 {dimension_numbers = #tpu.dot_dimension_numbers<[1], [1], [0], [0], [0, 0, 1, 0], [], []>} : vector<32x8xf32>, vector<128x8xf32>, vector<32x128xf32> -> vector<32x128xf32>
    %20 = arith.addf %17, %19 : vector<32x128xf32>
    %c0_11 = arith.constant 0 : index
    %c0_12 = arith.constant 0 : index
    %21 = vector.load %arg3[%c0_11, %c0_12] : memref<32x128xf32, #tpu.memory_space<vmem>>, vector<32x128xf32>
    %22 = arith.addf %20, %21 : vector<32x128xf32>
    %cst_13 = arith.constant 0.000000e+00 : f32
    %23 = vector.broadcast %cst_13 : f32 to vector<32x128xf32>
    %24 = arith.maximumf %22, %23 : vector<32x128xf32>
    %25 = math.absf %22 : vector<32x128xf32>
    %cst_14 = arith.constant 0.000000e+00 : f32
    %26 = vector.broadcast %cst_14 : f32 to vector<32x128xf32>
    %27 = arith.subf %26, %25 : vector<32x128xf32>
    %28 = math.exp %27 : vector<32x128xf32>
    %29 = math.log1p %28 : vector<32x128xf32>
    %30 = arith.addf %24, %29 : vector<32x128xf32>
    %c0_15 = arith.constant 0 : index
    %c0_16 = arith.constant 0 : index
    %31 = vector.load %arg6[%c0_15, %c0_16] : memref<32x32xf32, #tpu.memory_space<vmem>>, vector<32x32xf32>
    %cst_17 = arith.constant dense<0.000000e+00> : vector<32x128xf32>
    %32 = tpu.matmul %31, %30, %cst_17 {dimension_numbers = #tpu.dot_dimension_numbers<[1], [0], [0], [1], [0, 0, 1, 1], [], []>} : vector<32x32xf32>, vector<32x128xf32>, vector<32x128xf32> -> vector<32x128xf32>
    %c0_18 = arith.constant 0 : index
    %c0_19 = arith.constant 0 : index
    %33 = vector.load %arg8[%c0_18, %c0_19] : memref<32x1xf32, #tpu.memory_space<vmem>>, vector<32x1xf32>
    %34 = vector.broadcast %33 : vector<32x1xf32> to vector<32x128xf32>
    %35 = arith.addf %32, %34 : vector<32x128xf32>
    %cst_20 = arith.constant 0.000000e+00 : f32
    %36 = vector.broadcast %cst_20 : f32 to vector<32x128xf32>
    %37 = arith.maximumf %35, %36 : vector<32x128xf32>
    %38 = math.absf %35 : vector<32x128xf32>
    %cst_21 = arith.constant 0.000000e+00 : f32
    %39 = vector.broadcast %cst_21 : f32 to vector<32x128xf32>
    %40 = arith.subf %39, %38 : vector<32x128xf32>
    %41 = math.exp %40 : vector<32x128xf32>
    %42 = math.log1p %41 : vector<32x128xf32>
    %43 = arith.addf %37, %42 : vector<32x128xf32>
    %c0_22 = arith.constant 0 : index
    %c0_23 = arith.constant 0 : index
    %44 = vector.load %arg7[%c0_22, %c0_23] : memref<8x32xf32, #tpu.memory_space<vmem>>, vector<8x32xf32>
    %cst_24 = arith.constant dense<0.000000e+00> : vector<8x128xf32>
    %45 = tpu.matmul %44, %43, %cst_24 {dimension_numbers = #tpu.dot_dimension_numbers<[1], [0], [0], [1], [0, 0, 1, 1], [], []>} : vector<8x32xf32>, vector<32x128xf32>, vector<8x128xf32> -> vector<8x128xf32>
    %c0_25 = arith.constant 0 : index
    %c0_26 = arith.constant 0 : index
    %46 = vector.load %arg9[%c0_25, %c0_26] : memref<8x1xf32, #tpu.memory_space<vmem>>, vector<8x1xf32>
    %47 = vector.broadcast %46 : vector<8x1xf32> to vector<8x128xf32>
    %48 = arith.addf %45, %47 : vector<8x128xf32>
    %c0_27 = arith.constant 0 : index
    %c0_28 = arith.constant 0 : index
    %49 = vector.load %arg10[%c0_27, %c0_28] : memref<8x128xf32, #tpu.memory_space<vmem>>, vector<8x128xf32>
    tpu.vector_store %arg10[%c0_27, %c0_28], %48 {strides = array<i32>} : memref<8x128xf32, #tpu.memory_space<vmem>>, vector<8x128xf32>,
    return
  }
  func.func @transform_0(%arg0: i32) -> (i32, i32) {
    %c0_i32 = arith.constant 0 : i32
    %c0_i32_0 = arith.constant 0 : i32
    return %arg0, %c0_i32 : i32, i32
  }
  func.func @transform_1(%arg0: i32) -> (i32, i32) {
    %c0_i32 = arith.constant 0 : i32
    %c0_i32_0 = arith.constant 0 : i32
    return %arg0, %c0_i32 : i32, i32
  }
  func.func @transform_2(%arg0: i32) -> (i32, i32) {
    %c0_i32 = arith.constant 0 : i32
    %c0_i32_0 = arith.constant 0 : i32
    %c0_i32_1 = arith.constant 0 : i32
    return %c0_i32, %c0_i32_0 : i32, i32
  }
  func.func @transform_3(%arg0: i32) -> (i32, i32) {
    %c0_i32 = arith.constant 0 : i32
    %c0_i32_0 = arith.constant 0 : i32
    %c0_i32_1 = arith.constant 0 : i32
    return %c0_i32, %c0_i32_0 : i32, i32
  }
  func.func @transform_4(%arg0: i32) -> (i32, i32) {
    %c0_i32 = arith.constant 0 : i32
    %c0_i32_0 = arith.constant 0 : i32
    %c0_i32_1 = arith.constant 0 : i32
    return %c0_i32, %c0_i32_0 : i32, i32
  }
  func.func @transform_5(%arg0: i32) -> (i32, i32) {
    %c0_i32 = arith.constant 0 : i32
    %c0_i32_0 = arith.constant 0 : i32
    %c0_i32_1 = arith.constant 0 : i32
    return %c0_i32, %c0_i32_0 : i32, i32
  }
  func.func @transform_6(%arg0: i32) -> (i32, i32) {
    %c0_i32 = arith.constant 0 : i32
    %c0_i32_0 = arith.constant 0 : i32
    %c0_i32_1 = arith.constant 0 : i32
    return %c0_i32, %c0_i32_0 : i32, i32
  }
  func.func @transform_7(%arg0: i32) -> (i32, i32) {
    %c0_i32 = arith.constant 0 : i32
    %c0_i32_0 = arith.constant 0 : i32
    %c0_i32_1 = arith.constant 0 : i32
    return %c0_i32, %c0_i32_0 : i32, i32
  }
  func.func @transform_8(%arg0: i32) -> (i32, i32) {
    %c0_i32 = arith.constant 0 : i32
    %c0_i32_0 = arith.constant 0 : i32
    %c0_i32_1 = arith.constant 0 : i32
    return %c0_i32, %c0_i32_0 : i32, i32
  }
  func.func @transform_9(%arg0: i32) -> (i32, i32) {
    %c0_i32 = arith.constant 0 : i32
    %c0_i32_0 = arith.constant 0 : i32
    return %c0_i32, %arg0 : i32, i32
  }
}

</mosaic_0001>

<llo_original>
// kernel: tpu_custom_call.1
$region0: #{tpu_custom_call.1}
  #allocation0 [shape = 'u32[]', space=smem, size = 0x4, offset = 0x4, fixed_abs, tag = 'smem constant byte address 0x4 - core index']
  #allocation1 [shape = 'u32[144,128]{1,0:T(1,128)}', space=vmem, size = 0x12000, scoped, tag = 'internal scratch']
  %s0 = inlined_call_operand.vmem [shape: f32[128,8], index: 0, kind: input, shape index: {}]
  %s1 = inlined_call_operand.vmem [shape: f32[128,8], index: 1, kind: input, shape index: {}]
  %s2 = inlined_call_operand.vmem [shape: f32[32,128], index: 2, kind: input, shape index: {}]
  %s3 = inlined_call_operand.vmem [shape: f32[32,8], index: 3, kind: input, shape index: {}]
  %s4 = inlined_call_operand.vmem [shape: f32[32,8], index: 4, kind: input, shape index: {}]
  %s5 = inlined_call_operand.vmem [shape: f32[32,32], index: 5, kind: input, shape index: {}]
  %s6 = inlined_call_operand.vmem [shape: f32[8,32], index: 6, kind: input, shape index: {}]
  %s7 = inlined_call_operand.vmem [shape: f32[32,1], index: 7, kind: input, shape index: {}]
  %s8 = inlined_call_operand.vmem [shape: f32[8,1], index: 8, kind: input, shape index: {}]
  %s9 = inlined_call_operand.hbm [shape: f32[8,128], index: 9, kind: output, shape index: {}]
  %s10 = sld [smem:[#allocation0]]
  $region46: #{tpu_custom_call.1} parent=0
    _
  %s12 = ssub.s32 1, %s10
  %s13 = scalar_select 0, %s12, %s10
  $region1: #{tpu_custom_call.1} parent=0
    #allocation2 [shape = 'u8[4096]{0}', space=vmem, size = 0x1000, scoped, tag = 'output window, operand 0, single buffered']
    #allocation3 [shape = 's32[1]{0}', space=sflag, size = 0x4, scoped, tag = 'scoped memory for tpu_custom_call.1']
    %14 = vsyncpa [#allocation3], 0
    // Predicated region
    $region2: #{tpu_custom_call.1} parent=1 // pred_check
      _
    $region3: #{tpu_custom_call.1} parent=1 // pred_check_branch
      %16 = sbr.rel (0) target = $region5
    $region4: #{tpu_custom_call.1} parent=1 // pred_region
      _
    $region5: #{tpu_custom_call.1} parent=1 // pred_fallthru
      _
    // Predicated region
    $region6: #{tpu_custom_call.1} parent=1 // pred_check
      _
    $region7: #{tpu_custom_call.1} parent=1 // pred_check_branch
      %18 = sbr.rel (0) target = $region9
    $region8: #{tpu_custom_call.1} parent=1 // pred_region
      _
    $region9: #{tpu_custom_call.1} parent=1 // pred_fallthru
      _
    // Predicated region
    $region10: #{tpu_custom_call.1} parent=1 // pred_check
      _
    $region11: #{tpu_custom_call.1} parent=1 // pred_check_branch
      %20 = sbr.rel (0) target = $region13
    $region12: #{tpu_custom_call.1} parent=1 // pred_region
      _
    $region13: #{tpu_custom_call.1} parent=1 // pred_fallthru
      _
    // Predicated region
    $region14: #{tpu_custom_call.1} parent=1 // pred_check
      _
    $region15: #{tpu_custom_call.1} parent=1 // pred_check_branch
      %22 = sbr.rel (0) target = $region17
    $region16: #{tpu_custom_call.1} parent=1 // pred_region
      _
    $region17: #{tpu_custom_call.1} parent=1 // pred_fallthru
      _
    // Predicated region
    $region18: #{tpu_custom_call.1} parent=1 // pred_check
      _
    $region19: #{tpu_custom_call.1} parent=1 // pred_check_branch
      %24 = sbr.rel (0) target = $region21
    $region20: #{tpu_custom_call.1} parent=1 // pred_region
      _
    $region21: #{tpu_custom_call.1} parent=1 // pred_fallthru
      _
    // Predicated region
    $region22: #{tpu_custom_call.1} parent=1 // pred_check
      _
    $region23: #{tpu_custom_call.1} parent=1 // pred_check_branch
      %26 = sbr.rel (0) target = $region25
    $region24: #{tpu_custom_call.1} parent=1 // pred_region
      _
    $region25: #{tpu_custom_call.1} parent=1 // pred_fallthru
      _
    // Predicated region
    $region26: #{tpu_custom_call.1} parent=1 // pred_check
      _
    $region27: #{tpu_custom_call.1} parent=1 // pred_check_branch
      %28 = sbr.rel (0) target = $region29
    $region28: #{tpu_custom_call.1} parent=1 // pred_region
      _
    $region29: #{tpu_custom_call.1} parent=1 // pred_fallthru
      _
    // Predicated region
    $region30: #{tpu_custom_call.1} parent=1 // pred_check
      _
    $region31: #{tpu_custom_call.1} parent=1 // pred_check_branch
      %30 = sbr.rel (0) target = $region33
    $region32: #{tpu_custom_call.1} parent=1 // pred_region
      _
    $region33: #{tpu_custom_call.1} parent=1 // pred_fallthru
      _
    // Predicated region
    $region34: #{tpu_custom_call.1} parent=1 // pred_check
      _
    $region35: #{tpu_custom_call.1} parent=1 // pred_check_branch
      %32 = sbr.rel (0) target = $region37
    $region36: #{tpu_custom_call.1} parent=1 // pred_region
      _
    $region37: #{tpu_custom_call.1} parent=1 // pred_fallthru
      _
    %v33 = vld [vmem:[%s0] sm:$0xff]
    %v34 = vld [vmem:[%s0 + $0x8] sm:$0xff]
    %v35 = vld [vmem:[%s0 + $0x10] sm:$0xff]
    %v36 = vld [vmem:[%s0 + $0x18] sm:$0xff]
    %v37 = vld [vmem:[%s0 + $0x20] sm:$0xff]
    %v38 = vld [vmem:[%s0 + $0x28] sm:$0xff]
    %v39 = vld [vmem:[%s0 + $0x30] sm:$0xff]
    %v40 = vld [vmem:[%s0 + $0x38] sm:$0xff]
    %v41 = vld [vmem:[%s0 + $0x40] sm:$0xff]
    %v42 = vld [vmem:[%s0 + $0x48] sm:$0xff]
    %v43 = vld [vmem:[%s0 + $0x50] sm:$0xff]
    %v44 = vld [vmem:[%s0 + $0x58] sm:$0xff]
    %v45 = vld [vmem:[%s0 + $0x60] sm:$0xff]
    %v46 = vld [vmem:[%s0 + $0x68] sm:$0xff]
    %v47 = vld [vmem:[%s0 + $0x70] sm:$0xff]
    %v48 = vld [vmem:[%s0 + $0x78] sm:$0xff]
    %v49 = vld [vmem:[%s1] sm:$0xff]
    %v50 = vld [vmem:[%s1 + $0x8] sm:$0xff]
    %v51 = vld [vmem:[%s1 + $0x10] sm:$0xff]
    %v52 = vld [vmem:[%s1 + $0x18] sm:$0xff]
    %v53 = vld [vmem:[%s1 + $0x20] sm:$0xff]
    %v54 = vld [vmem:[%s1 + $0x28] sm:$0xff]
    %v55 = vld [vmem:[%s1 + $0x30] sm:$0xff]
    %v56 = vld [vmem:[%s1 + $0x38] sm:$0xff]
    %v57 = vld [vmem:[%s1 + $0x40] sm:$0xff]
    %v58 = vld [vmem:[%s1 + $0x48] sm:$0xff]
    %v59 = vld [vmem:[%s1 + $0x50] sm:$0xff]
    %v60 = vld [vmem:[%s1 + $0x58] sm:$0xff]
    %v61 = vld [vmem:[%s1 + $0x60] sm:$0xff]
    %v62 = vld [vmem:[%s1 + $0x68] sm:$0xff]
    %v63 = vld [vmem:[%s1 + $0x70] sm:$0xff]
    %v64 = vld [vmem:[%s1 + $0x78] sm:$0xff]
    %v65 = vlaneseq
    %v66 = vshrl.u32 %v65, 7
    %v67 = vlaneseq
    %v68 = vand.u32 %v67, 127
    %vm69 = vcmp.eq.s32.totalorder %v66, %v68
    %v70 = vsel %vm69, 1, 0
    %v71 = vcvt.s32.f32 %v70
    %vm72 = vcmask 64512
    %v74 = vsel %vm72, %v71, 0
    %v77 = vsel %vm72, %v33, 0
    %v80 = vsel %vm72, %v34, 0
    %v83 = vsel %vm72, %v35, 0
    %v86 = vsel %vm72, %v36, 0
    %v89 = vsel %vm72, %v37, 0
    %v92 = vsel %vm72, %v38, 0
    %v95 = vsel %vm72, %v39, 0
    %v98 = vsel %vm72, %v40, 0
    %v101 = vsel %vm72, %v41, 0
    %v104 = vsel %vm72, %v42, 0
    %v107 = vsel %vm72, %v43, 0
    %v110 = vsel %vm72, %v44, 0
    %v113 = vsel %vm72, %v45, 0
    %v116 = vsel %vm72, %v46, 0
    %v119 = vsel %vm72, %v47, 0
    %v122 = vsel %vm72, %v48, 0
    %124 = vmatprep.subr.mxu0 0.0
    %125 = vmatpush1.xpose.msra.mxu0 %v77
    %126 = vmatprep.subr.mxu0 0.0
    %127 = vmatpush1.xpose.msra.mxu0 %v80
    %128 = vmatprep.subr.mxu0 0.0
    %129 = vmatpush1.xpose.msra.mxu0 %v83
    %130 = vmatprep.subr.mxu0 0.0
    %131 = vmatpush1.xpose.msra.mxu0 %v86
    %132 = vmatprep.subr.mxu0 0.0
    %133 = vmatpush1.xpose.msra.mxu0 %v89
    %134 = vmatprep.subr.mxu0 0.0
    %135 = vmatpush1.xpose.msra.mxu0 %v92
    %136 = vmatprep.subr.mxu0 0.0
    %137 = vmatpush1.xpose.msra.mxu0 %v95
    %138 = vmatprep.subr.mxu0 0.0
    %139 = vmatpush1.xpose.msra.mxu0 %v98
    %140 = vmatprep.subr.mxu0 0.0
    %141 = vmatpush1.xpose.msra.mxu0 %v101
    %142 = vmatprep.subr.mxu0 0.0
    %143 = vmatpush1.xpose.msra.mxu0 %v104
    %144 = vmatprep.subr.mxu0 0.0
    %145 = vmatpush1.xpose.msra.mxu0 %v107
    %146 = vmatprep.subr.mxu0 0.0
    %147 = vmatpush1.xpose.msra.mxu0 %v110
    %148 = vmatprep.subr.mxu0 0.0
    %149 = vmatpush1.xpose.msra.mxu0 %v113
    %150 = vmatprep.subr.mxu0 0.0
    %151 = vmatpush1.xpose.msra.mxu0 %v116
    %152 = vmatprep.subr.mxu0 0.0
    %153 = vmatpush1.xpose.msra.mxu0 %v119
    %154 = vmatprep.subr.mxu0 0.0
    %155 = vmatpush1.xpose.msra.mxu0 %v122
    %156 = vmatprep.subr.mxu0 0.0
    %157 = vmatpush1.xpose.msra.mxu0 0.0
    %158 = vmatprep.subr.mxu0 0.0
    %159 = vmatpush1.xpose.msra.mxu0 0.0
    %160 = vmatprep.subr.mxu0 0.0
    %161 = vmatpush1.xpose.msra.mxu0 0.0
    %162 = vmatprep.subr.mxu0 0.0
    %163 = vmatpush1.xpose.msra.mxu0 0.0
    %164 = vmatprep.subr.mxu0 0.0
    %165 = vmatpush1.xpose.msra.mxu0 0.0
    %166 = vmatprep.subr.mxu0 0.0
    %167 = vmatpush1.xpose.msra.mxu0 0.0
    %168 = vmatprep.subr.mxu0 0.0
    %169 = vmatpush1.xpose.msra.mxu0 0.0
    %170 = vmatprep.subr.mxu0 0.0
    %171 = vmatpush1.xpose.msra.mxu0 0.0
    %172 = vmatprep.subr.mxu0 0.0
    %173 = vmatpush1.xpose.msra.mxu0 0.0
    %174 = vmatprep.subr.mxu0 0.0
    %175 = vmatpush1.xpose.msra.mxu0 0.0
    %176 = vmatprep.subr.mxu0 0.0
    %177 = vmatpush1.xpose.msra.mxu0 0.0
    %178 = vmatprep.subr.mxu0 0.0
    %179 = vmatpush1.xpose.msra.mxu0 0.0
    %180 = vmatprep.subr.mxu0 0.0
    %181 = vmatpush1.xpose.msra.mxu0 0.0
    %182 = vmatprep.subr.mxu0 0.0
    %183 = vmatpush1.xpose.msra.mxu0 0.0
    %184 = vmatprep.subr.mxu0 0.0
    %185 = vmatpush1.xpose.msra.mxu0 0.0
    %186 = vmatprep.subr.mxu0 0.0
    %187 = vmatpush1.xpose.msra.mxu0 0.0
    %188 = vmatprep.mubr.f32.mxu0 0.0
    %189 = vmatmul.mubr.f32.gmra.mrb[0].mxu0 %v74
    %v190 = vpop.f32.mrb[0].mxu0
    %v191 = vadd.f32 0.0, %v190
    %v192 = vpop.f32.mrb[0].mxu0
    %193 = vdwg.mxu0
    %v194 = vld [vmem:[%s3] sm:$0xff]
    %v195 = vld [vmem:[%s3 + $0x8] sm:$0xff]
    %v196 = vld [vmem:[%s3 + $0x10] sm:$0xff]
    %v197 = vld [vmem:[%s3 + $0x18] sm:$0xff]
    %v198 = vmax.f32 %v191, 0.0
    %v199 = vand.u32 2147483647, %v191
    %v200 = vsub.f32 0.0, %v199
    %v201 = vmul.f32 %v200, 1.442695
    %v202 = vpow.pop %v201
    %v203 = vadd.f32 %v202, 1.0
    %v204 = vlog2.pop %v203
    %v205 = vmul.f32 %v204, 0.6931472
    %v206 = vmul.f32 -0.5, %v202
    %v207 = vadd.f32 %v206, 1.0
    %v208 = vmul.f32 %v207, %v202
    %v209 = vand.u32 2147483647, %v202
    %vm210 = vcmp.lt.f32.partialorder %v209, 0.0004427343
    %v211 = vsel %vm210, %v208, %v205
    %v212 = vadd.f32 %v198, %v211
    %v213 = vld [vmem:[%s4] sm:$0xff]
    %v214 = vld [vmem:[%s4 + $0x8] sm:$0xff]
    %v215 = vld [vmem:[%s4 + $0x10] sm:$0xff]
    %v216 = vld [vmem:[%s4 + $0x18] sm:$0xff]
    %v218 = vsel %vm72, %v213, 0
    %v221 = vsel %vm72, %v214, 0
    %v224 = vsel %vm72, %v215, 0
    %v227 = vsel %vm72, %v216, 0
    %v230 = vsel %vm72, %v49, 0
    %v233 = vsel %vm72, %v50, 0
    %v236 = vsel %vm72, %v51, 0
    %v239 = vsel %vm72, %v52, 0
    %v242 = vsel %vm72, %v53, 0
    %v245 = vsel %vm72, %v54, 0
    %v248 = vsel %vm72, %v55, 0
    %v251 = vsel %vm72, %v56, 0
    %v254 = vsel %vm72, %v57, 0
    %v257 = vsel %vm72, %v58, 0
    %v260 = vsel %vm72, %v59, 0
    %v263 = vsel %vm72, %v60, 0
    %v266 = vsel %vm72, %v61, 0
    %v269 = vsel %vm72, %v62, 0
    %v272 = vsel %vm72, %v63, 0
    %v275 = vsel %vm72, %v64, 0
    %277 = vmatprep.subr.mxu0 0.0
    %278 = vmatpush1.xpose.msra.mxu0 %v230
    %279 = vmatprep.subr.mxu0 0.0
    %280 = vmatpush1.xpose.msra.mxu0 %v233
    %281 = vmatprep.subr.mxu0 0.0
    %282 = vmatpush1.xpose.msra.mxu0 %v236
    %283 = vmatprep.subr.mxu0 0.0
    %284 = vmatpush1.xpose.msra.mxu0 %v239
    %285 = vmatprep.subr.mxu0 0.0
    %286 = vmatpush1.xpose.msra.mxu0 %v242
    %287 = vmatprep.subr.mxu0 0.0
    %288 = vmatpush1.xpose.msra.mxu0 %v245
    %289 = vmatprep.subr.mxu0 0.0
    %290 = vmatpush1.xpose.msra.mxu0 %v248
    %291 = vmatprep.subr.mxu0 0.0
    %292 = vmatpush1.xpose.msra.mxu0 %v251
    %293 = vmatprep.subr.mxu0 0.0
    %294 = vmatpush1.xpose.msra.mxu0 %v254
    %295 = vmatprep.subr.mxu0 0.0
    %296 = vmatpush1.xpose.msra.mxu0 %v257
    %297 = vmatprep.subr.mxu0 0.0
    %298 = vmatpush1.xpose.msra.mxu0 %v260
    %299 = vmatprep.subr.mxu0 0.0
    %300 = vmatpush1.xpose.msra.mxu0 %v263
    %301 = vmatprep.subr.mxu0 0.0
    %302 = vmatpush1.xpose.msra.mxu0 %v266
    %303 = vmatprep.subr.mxu0 0.0
    %304 = vmatpush1.xpose.msra.mxu0 %v269
    %305 = vmatprep.subr.mxu0 0.0
    %306 = vmatpush1.xpose.msra.mxu0 %v272
    %307 = vmatprep.subr.mxu0 0.0
    %308 = vmatpush1.xpose.msra.mxu0 %v275
    %309 = vmatprep.subr.mxu0 0.0
    %310 = vmatpush1.xpose.msra.mxu0 0.0
    %311 = vmatprep.subr.mxu0 0.0
    %312 = vmatpush1.xpose.msra.mxu0 0.0
    %313 = vmatprep.subr.mxu0 0.0
    %314 = vmatpush1.xpose.msra.mxu0 0.0
    %315 = vmatprep.subr.mxu0 0.0
    %316 = vmatpush1.xpose.msra.mxu0 0.0
    %317 = vmatprep.subr.mxu0 0.0
    %318 = vmatpush1.xpose.msra.mxu0 0.0
    %319 = vmatprep.subr.mxu0 0.0
    %320 = vmatpush1.xpose.msra.mxu0 0.0
    %321 = vmatprep.subr.mxu0 0.0
    %322 = vmatpush1.xpose.msra.mxu0 0.0
    %323 = vmatprep.subr.mxu0 0.0
    %324 = vmatpush1.xpose.msra.mxu0 0.0
    %325 = vmatprep.subr.mxu0 0.0
    %326 = vmatpush1.xpose.msra.mxu0 0.0
    %327 = vmatprep.subr.mxu0 0.0
    %328 = vmatpush1.xpose.msra.mxu0 0.0
    %329 = vmatprep.subr.mxu0 0.0
    %330 = vmatpush1.xpose.msra.mxu0 0.0
    %331 = vmatprep.subr.mxu0 0.0
    %332 = vmatpush1.xpose.msra.mxu0 0.0
    %333 = vmatprep.subr.mxu0 0.0
    %334 = vmatpush1.xpose.msra.mxu0 0.0
    %335 = vmatprep.subr.mxu0 0.0
    %336 = vmatpush1.xpose.msra.mxu0 0.0
    %337 = vmatprep.subr.mxu0 0.0
    %338 = vmatpush1.xpose.msra.mxu0 0.0
    %339 = vmatprep.subr.mxu0 0.0
    %340 = vmatpush1.xpose.msra.mxu0 0.0
    %341 = vmatprep.mubr.f32.mxu0 0.0
    %342 = vmatmul.mubr.f32.gmra.mrb[0].mxu0 %v218
    %v343 = vpop.f32.mrb[0].mxu0
    %v344 = vadd.f32 0.0, %v343
    %v345 = vpop.f32.mrb[0].mxu0
    %346 = vmatprep.mubr.f32.mxu0 0.0
    %347 = vmatmul.mubr.f32.gmra.mrb[0].mxu0 %v221
    %v348 = vpop.f32.mrb[0].mxu0
    %v349 = vadd.f32 0.0, %v348
    %v350 = vpop.f32.mrb[0].mxu0
    %351 = vmatprep.mubr.f32.mxu0 0.0
    %352 = vmatmul.mubr.f32.gmra.mrb[0].mxu0 %v224
    %v353 = vpop.f32.mrb[0].mxu0
    %v354 = vadd.f32 0.0, %v353
    %v355 = vpop.f32.mrb[0].mxu0
    %356 = vmatprep.mubr.f32.mxu0 0.0
    %357 = vmatmul.mubr.f32.gmra.mrb[0].mxu0 %v227
    %v358 = vpop.f32.mrb[0].mxu0
    %v359 = vadd.f32 0.0, %v358
    %v360 = vpop.f32.mrb[0].mxu0
    %361 = vdwg.mxu0
    %v363 = vsel %vm72, %v194, 0
    %v366 = vsel %vm72, %v195, 0
    %v369 = vsel %vm72, %v196, 0
    %v372 = vsel %vm72, %v197, 0
    %374 = vmatprep.subr.mxu0 0.0
    %375 = vmatpush1.msra.mxu0 %v212
    %376 = vmatprep.subr.mxu0 0.0
    %377 = vmatpush1.msra.mxu0 0.0
    %378 = vmatprep.subr.mxu0 0.0
    %379 = vmatpush1.msra.mxu0 0.0
    %380 = vmatprep.subr.mxu0 0.0
    %381 = vmatpush1.msra.mxu0 0.0
    %382 = vmatprep.subr.mxu0 0.0
    %383 = vmatpush1.msra.mxu0 0.0
    %384 = vmatprep.subr.mxu0 0.0
    %385 = vmatpush1.msra.mxu0 0.0
    %386 = vmatprep.subr.mxu0 0.0
    %387 = vmatpush1.msra.mxu0 0.0
    %388 = vmatprep.subr.mxu0 0.0
    %389 = vmatpush1.msra.mxu0 0.0
    %390 = vmatprep.subr.mxu0 0.0
    %391 = vmatpush1.msra.mxu0 0.0
    %392 = vmatprep.subr.mxu0 0.0
    %393 = vmatpush1.msra.mxu0 0.0
    %394 = vmatprep.subr.mxu0 0.0
    %395 = vmatpush1.msra.mxu0 0.0
    %396 = vmatprep.subr.mxu0 0.0
    %397 = vmatpush1.msra.mxu0 0.0
    %398 = vmatprep.subr.mxu0 0.0
    %399 = vmatpush1.msra.mxu0 0.0
    %400 = vmatprep.subr.mxu0 0.0
    %401 = vmatpush1.msra.mxu0 0.0
    %402 = vmatprep.subr.mxu0 0.0
    %403 = vmatpush1.msra.mxu0 0.0
    %404 = vmatprep.subr.mxu0 0.0
    %405 = vmatpush1.msra.mxu0 0.0
    %406 = vmatprep.subr.mxu0 0.0
    %407 = vmatpush1.msra.mxu0 0.0
    %408 = vmatprep.subr.mxu0 0.0
    %409 = vmatpush1.msra.mxu0 0.0
    %410 = vmatprep.subr.mxu0 0.0
    %411 = vmatpush1.msra.mxu0 0.0
    %412 = vmatprep.subr.mxu0 0.0
    %413 = vmatpush1.msra.mxu0 0.0
    %414 = vmatprep.subr.mxu0 0.0
    %415 = vmatpush1.msra.mxu0 0.0
    %416 = vmatprep.subr.mxu0 0.0
    %417 = vmatpush1.msra.mxu0 0.0
    %418 = vmatprep.subr.mxu0 0.0
    %419 = vmatpush1.msra.mxu0 0.0
    %420 = vmatprep.subr.mxu0 0.0
    %421 = vmatpush1.msra.mxu0 0.0
    %422 = vmatprep.subr.mxu0 0.0
    %423 = vmatpush1.msra.mxu0 0.0
    %424 = vmatprep.subr.mxu0 0.0
    %425 = vmatpush1.msra.mxu0 0.0
    %426 = vmatprep.subr.mxu0 0.0
    %427 = vmatpush1.msra.mxu0 0.0
    %428 = vmatprep.subr.mxu0 0.0
    %429 = vmatpush1.msra.mxu0 0.0
    %430 = vmatprep.subr.mxu0 0.0
    %431 = vmatpush1.msra.mxu0 0.0
    %432 = vmatprep.subr.mxu0 0.0
    %433 = vmatpush1.msra.mxu0 0.0
    %434 = vmatprep.subr.mxu0 0.0
    %435 = vmatpush1.msra.mxu0 0.0
    %436 = vmatprep.subr.mxu0 0.0
    %437 = vmatpush1.msra.mxu0 0.0
    %438 = vmatprep.mubr.f32.mxu0 0.0
    %439 = vmatmul.mubr.f32.gmra.mrb[0].mxu0 %v363
    %v440 = vpop.f32.mrb[0].mxu0
    %v441 = vadd.f32 %v344, %v440
    %v442 = vpop.f32.mrb[0].mxu0
    %443 = vmatprep.mubr.f32.mxu0 0.0
    %444 = vmatmul.mubr.f32.gmra.mrb[0].mxu0 %v366
    %v445 = vpop.f32.mrb[0].mxu0
    %v446 = vadd.f32 %v349, %v445
    %v447 = vpop.f32.mrb[0].mxu0
    %448 = vmatprep.mubr.f32.mxu0 0.0
    %449 = vmatmul.mubr.f32.gmra.mrb[0].mxu0 %v369
    %v450 = vpop.f32.mrb[0].mxu0
    %v451 = vadd.f32 %v354, %v450
    %v452 = vpop.f32.mrb[0].mxu0
    %453 = vmatprep.mubr.f32.mxu0 0.0
    %454 = vmatmul.mubr.f32.gmra.mrb[0].mxu0 %v372
    %v455 = vpop.f32.mrb[0].mxu0
    %v456 = vadd.f32 %v359, %v455
    %v457 = vpop.f32.mrb[0].mxu0
    %458 = vdwg.mxu0
    %v459 = vld [vmem:[%s2] sm:$0xff]
    %v460 = vld [vmem:[%s2 + $0x8] sm:$0xff]
    %v461 = vld [vmem:[%s2 + $0x10] sm:$0xff]
    %v462 = vld [vmem:[%s2 + $0x18] sm:$0xff]
    %v463 = vadd.f32 %v441, %v459
    %v464 = vadd.f32 %v446, %v460
    %v465 = vadd.f32 %v451, %v461
    %v466 = vadd.f32 %v456, %v462
    %v467 = vmax.f32 %v463, 0.0
    %v468 = vmax.f32 %v464, 0.0
    %v469 = vmax.f32 %v465, 0.0
    %v470 = vmax.f32 %v466, 0.0
    %v471 = vand.u32 2147483647, %v463
    %v472 = vand.u32 2147483647, %v464
    %v473 = vand.u32 2147483647, %v465
    %v474 = vand.u32 2147483647, %v466
    %v475 = vsub.f32 0.0, %v471
    %v476 = vsub.f32 0.0, %v472
    %v477 = vsub.f32 0.0, %v473
    %v478 = vsub.f32 0.0, %v474
    %v479 = vmul.f32 %v475, 1.442695
    %v480 = vpow.pop %v479
    %v481 = vmul.f32 %v476, 1.442695
    %v482 = vpow.pop %v481
    %v483 = vmul.f32 %v477, 1.442695
    %v484 = vpow.pop %v483
    %v485 = vmul.f32 %v478, 1.442695
    %v486 = vpow.pop %v485
    %v487 = vadd.f32 %v480, 1.0
    %v488 = vlog2.pop %v487
    %v489 = vmul.f32 %v488, 0.6931472
    %v490 = vmul.f32 -0.5, %v480
    %v491 = vadd.f32 %v490, 1.0
    %v492 = vmul.f32 %v491, %v480
    %v493 = vand.u32 2147483647, %v480
    %vm494 = vcmp.lt.f32.partialorder %v493, 0.0004427343
    %v495 = vsel %vm494, %v492, %v489
    %v496 = vadd.f32 %v482, 1.0
    %v497 = vlog2.pop %v496
    %v498 = vmul.f32 %v497, 0.6931472
    %v499 = vmul.f32 -0.5, %v482
    %v500 = vadd.f32 %v499, 1.0
    %v501 = vmul.f32 %v500, %v482
    %v502 = vand.u32 2147483647, %v482
    %vm503 = vcmp.lt.f32.partialorder %v502, 0.0004427343
    %v504 = vsel %vm503, %v501, %v498
    %v505 = vadd.f32 %v484, 1.0
    %v506 = vlog2.pop %v505
    %v507 = vmul.f32 %v506, 0.6931472
    %v508 = vmul.f32 -0.5, %v484
    %v509 = vadd.f32 %v508, 1.0
    %v510 = vmul.f32 %v509, %v484
    %v511 = vand.u32 2147483647, %v484
    %vm512 = vcmp.lt.f32.partialorder %v511, 0.0004427343
    %v513 = vsel %vm512, %v510, %v507
    %v514 = vadd.f32 %v486, 1.0
    %v515 = vlog2.pop %v514
    %v516 = vmul.f32 %v515, 0.6931472
    %v517 = vmul.f32 -0.5, %v486
    %v518 = vadd.f32 %v517, 1.0
    %v519 = vmul.f32 %v518, %v486
    %v520 = vand.u32 2147483647, %v486
    %vm521 = vcmp.lt.f32.partialorder %v520, 0.0004427343
    %v522 = vsel %vm521, %v519, %v516
    %v523 = vadd.f32 %v467, %v495
    %v524 = vadd.f32 %v468, %v504
    %v525 = vadd.f32 %v469, %v513
    %v526 = vadd.f32 %v470, %v522
    %v527 = vld [vmem:[%s5] sm:$0xff]
    %v528 = vld [vmem:[%s5 + $0x8] sm:$0xff]
    %v529 = vld [vmem:[%s5 + $0x10] sm:$0xff]
    %v530 = vld [vmem:[%s5 + $0x18] sm:$0xff]
    %v531 = vld [vmem:[%s7] sm:$0xff]
    %v532 = vld [vmem:[%s7 + $0x8] sm:$0xff]
    %v533 = vld [vmem:[%s7 + $0x10] sm:$0xff]
    %v534 = vld [vmem:[%s7 + $0x18] sm:$0xff]
    %536 = vset.pattern.permute.xlu0 0
    %537 = vperm.xlu0 %536, %v531
    %v538 = vpop.permute.xlu0 %537
    %541 = vset.pattern.permute.xlu0 0
    %542 = vperm.xlu0 %541, %v532
    %v543 = vpop.permute.xlu0 %542
    %546 = vset.pattern.permute.xlu0 0
    %547 = vperm.xlu0 %546, %v533
    %v548 = vpop.permute.xlu0 %547
    %551 = vset.pattern.permute.xlu0 0
    %552 = vperm.xlu0 %551, %v534
    %v553 = vpop.permute.xlu0 %552
    %vm555 = vcmask 261120
    %v557 = vsel %vm555, %v527, 0
    %v560 = vsel %vm555, %v528, 0
    %v563 = vsel %vm555, %v529, 0
    %v566 = vsel %vm555, %v530, 0
    %568 = vmatprep.subr.mxu0 0.0
    %569 = vmatpush1.msra.mxu0 %v523
    %570 = vmatprep.subr.mxu0 0.0
    %571 = vmatpush1.msra.mxu0 %v524
    %572 = vmatprep.subr.mxu0 0.0
    %573 = vmatpush1.msra.mxu0 %v525
    %574 = vmatprep.subr.mxu0 0.0
    %575 = vmatpush1.msra.mxu0 %v526
    %576 = vmatprep.subr.mxu0 0.0
    %577 = vmatpush1.msra.mxu0 0.0
    %578 = vmatprep.subr.mxu0 0.0
    %579 = vmatpush1.msra.mxu0 0.0
    %580 = vmatprep.subr.mxu0 0.0
    %581 = vmatpush1.msra.mxu0 0.0
    %582 = vmatprep.subr.mxu0 0.0
    %583 = vmatpush1.msra.mxu0 0.0
    %584 = vmatprep.subr.mxu0 0.0
    %585 = vmatpush1.msra.mxu0 0.0
    %586 = vmatprep.subr.mxu0 0.0
    %587 = vmatpush1.msra.mxu0 0.0
    %588 = vmatprep.subr.mxu0 0.0
    %589 = vmatpush1.msra.mxu0 0.0
    %590 = vmatprep.subr.mxu0 0.0
    %591 = vmatpush1.msra.mxu0 0.0
    %592 = vmatprep.subr.mxu0 0.0
    %593 = vmatpush1.msra.mxu0 0.0
    %594 = vmatprep.subr.mxu0 0.0
    %595 = vmatpush1.msra.mxu0 0.0
    %596 = vmatprep.subr.mxu0 0.0
    %597 = vmatpush1.msra.mxu0 0.0
    %598 = vmatprep.subr.mxu0 0.0
    %599 = vmatpush1.msra.mxu0 0.0
    %600 = vmatprep.subr.mxu0 0.0
    %601 = vmatpush1.msra.mxu0 0.0
    %602 = vmatprep.subr.mxu0 0.0
    %603 = vmatpush1.msra.mxu0 0.0
    %604 = vmatprep.subr.mxu0 0.0
    %605 = vmatpush1.msra.mxu0 0.0
    %606 = vmatprep.subr.mxu0 0.0
    %607 = vmatpush1.msra.mxu0 0.0
    %608 = vmatprep.subr.mxu0 0.0
    %609 = vmatpush1.msra.mxu0 0.0
    %610 = vmatprep.subr.mxu0 0.0
    %611 = vmatpush1.msra.mxu0 0.0
    %612 = vmatprep.subr.mxu0 0.0
    %613 = vmatpush1.msra.mxu0 0.0
    %614 = vmatprep.subr.mxu0 0.0
    %615 = vmatpush1.msra.mxu0 0.0
    %616 = vmatprep.subr.mxu0 0.0
    %617 = vmatpush1.msra.mxu0 0.0
    %618 = vmatprep.subr.mxu0 0.0
    %619 = vmatpush1.msra.mxu0 0.0
    %620 = vmatprep.subr.mxu0 0.0
    %621 = vmatpush1.msra.mxu0 0.0
    %622 = vmatprep.subr.mxu0 0.0
    %623 = vmatpush1.msra.mxu0 0.0
    %624 = vmatprep.subr.mxu0 0.0
    %625 = vmatpush1.msra.mxu0 0.0
    %626 = vmatprep.subr.mxu0 0.0
    %627 = vmatpush1.msra.mxu0 0.0
    %628 = vmatprep.subr.mxu0 0.0
    %629 = vmatpush1.msra.mxu0 0.0
    %630 = vmatprep.subr.mxu0 0.0
    %631 = vmatpush1.msra.mxu0 0.0
    %632 = vmatprep.mubr.f32.mxu0 0.0
    %633 = vmatmul.mubr.f32.gmra.mrb[0].mxu0 %v557
    %v634 = vpop.f32.mrb[0].mxu0
    %v635 = vadd.f32 %v538, %v634
    %v636 = vpop.f32.mrb[0].mxu0
    %637 = vmatprep.mubr.f32.mxu0 0.0
    %638 = vmatmul.mubr.f32.gmra.mrb[0].mxu0 %v560
    %v639 = vpop.f32.mrb[0].mxu0
    %v640 = vadd.f32 %v543, %v639
    %v641 = vpop.f32.mrb[0].mxu0
    %642 = vmatprep.mubr.f32.mxu0 0.0
    %643 = vmatmul.mubr.f32.gmra.mrb[0].mxu0 %v563
    %v644 = vpop.f32.mrb[0].mxu0
    %v645 = vadd.f32 %v548, %v644
    %v646 = vpop.f32.mrb[0].mxu0
    %647 = vmatprep.mubr.f32.mxu0 0.0
    %648 = vmatmul.mubr.f32.gmra.mrb[0].mxu0 %v566
    %v649 = vpop.f32.mrb[0].mxu0
    %v650 = vadd.f32 %v553, %v649
    %v651 = vpop.f32.mrb[0].mxu0
    %652 = vdwg.mxu0
    %v653 = vmax.f32 %v635, 0.0
    %v654 = vmax.f32 %v640, 0.0
    %v655 = vmax.f32 %v645, 0.0
    %v656 = vmax.f32 %v650, 0.0
    %v657 = vand.u32 2147483647, %v635
    %v658 = vand.u32 2147483647, %v640
    %v659 = vand.u32 2147483647, %v645
    %v660 = vand.u32 2147483647, %v650
    %v661 = vsub.f32 0.0, %v657
    %v662 = vsub.f32 0.0, %v658
    %v663 = vsub.f32 0.0, %v659
    %v664 = vsub.f32 0.0, %v660
    %v665 = vmul.f32 %v661, 1.442695
    %v666 = vpow.pop %v665
    %v667 = vmul.f32 %v662, 1.442695
    %v668 = vpow.pop %v667
    %v669 = vmul.f32 %v663, 1.442695
    %v670 = vpow.pop %v669
    %v671 = vmul.f32 %v664, 1.442695
    %v672 = vpow.pop %v671
    %v673 = vadd.f32 %v666, 1.0
    %v674 = vlog2.pop %v673
    %v675 = vmul.f32 %v674, 0.6931472
    %v676 = vmul.f32 -0.5, %v666
    %v677 = vadd.f32 %v676, 1.0
    %v678 = vmul.f32 %v677, %v666
    %v679 = vand.u32 2147483647, %v666
    %vm680 = vcmp.lt.f32.partialorder %v679, 0.0004427343
    %v681 = vsel %vm680, %v678, %v675
    %v682 = vadd.f32 %v668, 1.0
    %v683 = vlog2.pop %v682
    %v684 = vmul.f32 %v683, 0.6931472
    %v685 = vmul.f32 -0.5, %v668
    %v686 = vadd.f32 %v685, 1.0
    %v687 = vmul.f32 %v686, %v668
    %v688 = vand.u32 2147483647, %v668
    %vm689 = vcmp.lt.f32.partialorder %v688, 0.0004427343
    %v690 = vsel %vm689, %v687, %v684
    %v691 = vadd.f32 %v670, 1.0
    %v692 = vlog2.pop %v691
    %v693 = vmul.f32 %v692, 0.6931472
    %v694 = vmul.f32 -0.5, %v670
    %v695 = vadd.f32 %v694, 1.0
    %v696 = vmul.f32 %v695, %v670
    %v697 = vand.u32 2147483647, %v670
    %vm698 = vcmp.lt.f32.partialorder %v697, 0.0004427343
    %v699 = vsel %vm698, %v696, %v693
    %v700 = vadd.f32 %v672, 1.0
    %v701 = vlog2.pop %v700
    %v702 = vmul.f32 %v701, 0.6931472
    %v703 = vmul.f32 -0.5, %v672
    %v704 = vadd.f32 %v703, 1.0
    %v705 = vmul.f32 %v704, %v672
    %v706 = vand.u32 2147483647, %v672
    %vm707 = vcmp.lt.f32.partialorder %v706, 0.0004427343
    %v708 = vsel %vm707, %v705, %v702
    %v709 = vadd.f32 %v653, %v681
    %v710 = vadd.f32 %v654, %v690
    %v711 = vadd.f32 %v655, %v699
    %v712 = vadd.f32 %v656, %v708
    %v713 = vld [vmem:[%s6] sm:$0xff]
    %v714 = vld [vmem:[%s8] sm:$0xff]
    %716 = vset.pattern.permute.xlu0 0
    %717 = vperm.xlu0 %716, %v714
    %v718 = vpop.permute.xlu0 %717
    %v721 = vsel %vm555, %v713, 0
    %723 = vmatprep.subr.mxu0 0.0
    %724 = vmatpush1.msra.mxu0 %v709
    %725 = vmatprep.subr.mxu0 0.0
    %726 = vmatpush1.msra.mxu0 %v710
    %727 = vmatprep.subr.mxu0 0.0
    %728 = vmatpush1.msra.mxu0 %v711
    %729 = vmatprep.subr.mxu0 0.0
    %730 = vmatpush1.msra.mxu0 %v712
    %731 = vmatprep.subr.mxu0 0.0
    %732 = vmatpush1.msra.mxu0 0.0
    %733 = vmatprep.subr.mxu0 0.0
    %734 = vmatpush1.msra.mxu0 0.0
    %735 = vmatprep.subr.mxu0 0.0
    %736 = vmatpush1.msra.mxu0 0.0
    %737 = vmatprep.subr.mxu0 0.0
    %738 = vmatpush1.msra.mxu0 0.0
    %739 = vmatprep.subr.mxu0 0.0
    %740 = vmatpush1.msra.mxu0 0.0
    %741 = vmatprep.subr.mxu0 0.0
    %742 = vmatpush1.msra.mxu0 0.0
    %743 = vmatprep.subr.mxu0 0.0
    %744 = vmatpush1.msra.mxu0 0.0
    %745 = vmatprep.subr.mxu0 0.0
    %746 = vmatpush1.msra.mxu0 0.0
    %747 = vmatprep.subr.mxu0 0.0
    %748 = vmatpush1.msra.mxu0 0.0
    %749 = vmatprep.subr.mxu0 0.0
    %750 = vmatpush1.msra.mxu0 0.0
    %751 = vmatprep.subr.mxu0 0.0
    %752 = vmatpush1.msra.mxu0 0.0
    %753 = vmatprep.subr.mxu0 0.0
    %754 = vmatpush1.msra.mxu0 0.0
    %755 = vmatprep.subr.mxu0 0.0
    %756 = vmatpush1.msra.mxu0 0.0
    %757 = vmatprep.subr.mxu0 0.0
    %758 = vmatpush1.msra.mxu0 0.0
    %759 = vmatprep.subr.mxu0 0.0
    %760 = vmatpush1.msra.mxu0 0.0
    %761 = vmatprep.subr.mxu0 0.0
    %762 = vmatpush1.msra.mxu0 0.0
    %763 = vmatprep.subr.mxu0 0.0
    %764 = vmatpush1.msra.mxu0 0.0
    %765 = vmatprep.subr.mxu0 0.0
    %766 = vmatpush1.msra.mxu0 0.0
    %767 = vmatprep.subr.mxu0 0.0
    %768 = vmatpush1.msra.mxu0 0.0
    %769 = vmatprep.subr.mxu0 0.0
    %770 = vmatpush1.msra.mxu0 0.0
    %771 = vmatprep.subr.mxu0 0.0
    %772 = vmatpush1.msra.mxu0 0.0
    %773 = vmatprep.subr.mxu0 0.0
    %774 = vmatpush1.msra.mxu0 0.0
    %775 = vmatprep.subr.mxu0 0.0
    %776 = vmatpush1.msra.mxu0 0.0
    %777 = vmatprep.subr.mxu0 0.0
    %778 = vmatpush1.msra.mxu0 0.0
    %779 = vmatprep.subr.mxu0 0.0
    %780 = vmatpush1.msra.mxu0 0.0
    %781 = vmatprep.subr.mxu0 0.0
    %782 = vmatpush1.msra.mxu0 0.0
    %783 = vmatprep.subr.mxu0 0.0
    %784 = vmatpush1.msra.mxu0 0.0
    %785 = vmatprep.subr.mxu0 0.0
    %786 = vmatpush1.msra.mxu0 0.0
    %787 = vmatprep.mubr.f32.mxu0 0.0
    %788 = vmatmul.mubr.f32.gmra.mrb[0].mxu0 %v721
    %v789 = vpop.f32.mrb[0].mxu0
    %v790 = vadd.f32 %v718, %v789
    %v791 = vpop.f32.mrb[0].mxu0
    %792 = vdwg.mxu0
    %793 = vst [vmem:[#allocation2] sm:$0xff] %v790
    // Predicated region
    $region38: #{tpu_custom_call.1} parent=1 // pred_check
      _
    $region39: #{tpu_custom_call.1} parent=1 // pred_check_branch
      %795 = sbr.rel (0) target = $region41
    $region40: #{tpu_custom_call.1} parent=1 // pred_region
      %s797 = ssub.s32 128, 128
      %798 = vsyncadd [#allocation3], %s797
      %s800 = sshll.u32 [#allocation2], 4
      %s801 = int_to_ptr.vmem [resolvable:$true] %s800
      %803 = dma.vmem_to_hbm [thread:$0]  %s801, 128, %s9, [#allocation3]
    $region41: #{tpu_custom_call.1} parent=1 // pred_fallthru
      _
    // Predicated region
    $region42: #{tpu_custom_call.1} parent=1 // pred_check
      _
    $region43: #{tpu_custom_call.1} parent=1 // pred_check_branch
      %805 = sbr.rel (0) target = $region45
    $region44: #{tpu_custom_call.1} parent=1 // pred_region
      %806 = dma.done [#allocation3], 128
    $region45: #{tpu_custom_call.1} parent=1 // pred_fallthru
      _
    %807 = vsyncpa [#allocation3], 1

</llo_original>
